<compile_context>
chip_gen: v5e
topology: v5e:2x2
jax: 0.10.0
libtpu: 0.0.40
codegen_flags: <defaults>
</compile_context>

<pallas_src>
import math

import jax
import jax.numpy as jnp
from jax.experimental import pallas as pl
from jax.experimental.pallas import tpu as pltpu


# ---------------------------------------------------------------------------
# VMEM budgeting (generation aware, padded-shape accounting).
# ---------------------------------------------------------------------------

def _pad_up(v, m):
    return ((v + m - 1) // m) * m


def _sublane_granule(itemsize):
    # native VMEM tile is (8 * packing, 128) with packing = 4 / itemsize
    return max(8, 32 // itemsize)


def _block_vmem_bytes(rows, cols, itemsize):
    """Padded VMEM footprint of one (rows, cols) block."""
    return _pad_up(rows, _sublane_granule(itemsize)) * _pad_up(cols, 128) * itemsize


def _vmem_budgets():
    """(per-block budget, vmem_limit_bytes), generation aware.

    The budget leaves room for 2x double-buffered input + 2x output blocks
    plus the (small) halo buffers and Mosaic internal scratch."""
    try:
        cap = int(pltpu.get_tpu_info().vmem_capacity_bytes)
    except Exception:
        cap = 64 * 1024 * 1024              # conservative fallback
    if cap >= 100 * 1024 * 1024:            # 128 MiB parts (v5e / v6e)
        return 8 * 1024 * 1024, 64 * 1024 * 1024
    # 64 MiB parts (v7x): 4 * 3.5 MiB + halos stays well under the 48 MiB limit
    return 3584 * 1024, 48 * 1024 * 1024


def _pick_channel_tile(C, HW, itemsize, B, block_budget):
    """Largest divisor-of-C channel tile (multiple of the dtype's sublane pack
    granule) whose padded (Ct, HW) block fits `block_budget`; big tiles dilute
    the halo overhead (2*halo_c/Ct extra HBM reads).  For B == 1, cap at C/2 so
    the v7x megacore still gets >= 2 parallel grid steps."""
    sub = _sublane_granule(itemsize)
    if C % sub == 0:
        gran = sub
    elif C % 8 == 0:
        gran = 8
    else:
        return C
    max_ct = C
    if B < 2 and C % (2 * gran) == 0:
        max_ct = C // 2
    best = gran
    for ct in range(gran, max_ct + 1, gran):
        if C % ct == 0 and _block_vmem_bytes(ct, HW, itemsize) <= block_budget:
            best = ct
    return best


def _pick_spatial_fold(C, HW, pad, itemsize, block_budget):
    """For HW < 128, fold g adjacent channels per row (free contiguous reshape
    (B, C, HW) -> (B, C/g, g*HW)) so rows are lane-dense.  Returns g or None."""
    if HW >= 128:
        return None
    best_key, best_g = None, None
    for g in range(2, min(C, 512 // HW, 64) + 1):
        if C % g or C // g < 2 or pad > g:
            continue
        if _block_vmem_bytes(C // g, g * HW, itemsize) > block_budget:
            continue
        width = g * HW
        key = (width / _pad_up(width, 128), width)   # lane utilization, then width
        if best_key is None or key > best_key:
            best_key, best_g = key, g
    return best_g


# ---------------------------------------------------------------------------
# Kernels.
# ---------------------------------------------------------------------------

def _make_eca_kernel(*, k, pad, nct, use_halo, halo_c):
    """Channel-tiled kernel: block = (Ct, HW), optional 8/16-channel halos."""
    def kernel(w_ref, *refs):
        if use_halo:
            x_ref, xl_ref, xr_ref, o_ref = refs
        else:
            x_ref, o_ref = refs

        x_t = x_ref[...]                                    # (Ct, HW), input dtype
        ct = x_t.shape[0]

        # 1) per-channel spatial sum, f32 accumulator (1/HW folded into taps).
        s_main = jnp.sum(x_t, axis=-1, keepdims=True, dtype=jnp.float32)   # (Ct, 1)

        # 2) extend with (k-1)//2 neighbouring channels; channels outside [0, C)
        #    are zeroed, reproducing Conv1d's zero padding.
        if pad > 0:
            if use_halo:
                i = pl.program_id(1)
                s_l = jnp.sum(xl_ref[...], axis=-1, keepdims=True, dtype=jnp.float32)
                s_r = jnp.sum(xr_ref[...], axis=-1, keepdims=True, dtype=jnp.float32)
                left = jnp.where(i > 0, s_l[halo_c - pad:, :], 0.0)        # (pad, 1)
                right = jnp.where(i < nct - 1, s_r[:pad, :], 0.0)          # (pad, 1)
            else:
                left = jnp.zeros((pad, 1), jnp.float32)
                right = jnp.zeros((pad, 1), jnp.float32)
            pooled_ext = jnp.concatenate([left, s_main, right], axis=0)    # (Ct+2p, 1)
        else:
            pooled_ext = s_main

        # 3) Conv1d across channels == k shifted adds (VPU), sigmoid gate (EUP).
        y = w_ref[0] * pooled_ext[0:ct, :]
        for j in range(1, k):
            y = y + w_ref[j] * pooled_ext[j:j + ct, :]
        gate = jax.nn.sigmoid(y).astype(o_ref.dtype)                       # (Ct, 1)

        # 4) rescale this channel tile (stays in the input dtype).
        o_ref[...] = x_t * gate

    return kernel


def _make_eca_folded_kernel(*, k, pad, g, hw, rows):
    """Lane-dense kernel for HW < 128: each row holds g whole channels."""
    def kernel(w_ref, x_ref, o_ref):
        x_t = x_ref[...]                                    # (rows, g*hw)
        width = g * hw
        grp = jax.lax.broadcasted_iota(jnp.int32, (rows, width), 1) // hw
        col = jax.lax.broadcasted_iota(jnp.int32, (rows, g), 1)
        zero = jnp.zeros((), x_t.dtype)

        # 1) segmented per-channel spatial sums, exact f32 accumulation
        #    (the 1/(H*W) of the average pool is folded into the taps).
        s = jnp.zeros((rows, g), jnp.float32)
        for j in range(g):
            s_j = jnp.sum(jnp.where(grp == j, x_t, zero), axis=-1,
                          keepdims=True, dtype=jnp.float32)                # (rows, 1)
            s = s + jnp.where(col == j, s_j, 0.0)

        # 2) 1-D channel conv over the flat channel order: extend each row with
        #    the last `pad` channels of the previous row and the first `pad`
        #    channels of the next row (zero rows at the global ends reproduce
        #    Conv1d's zero padding), then k shifted adds (VPU only).
        if pad > 0:
            zrow = jnp.zeros((1, g), jnp.float32)
            s_dn = jnp.concatenate([s[1:, :], zrow], axis=0)               # s[r+1]
            s_up = jnp.concatenate([zrow, s[:-1, :]], axis=0)              # s[r-1]
            s_ext = jnp.concatenate(
                [s_up[:, g - pad:], s, s_dn[:, :pad]], axis=1)             # (rows, g+2p)
        else:
            s_ext = s
        y = w_ref[0] * s_ext[:, 0:g]
        for j in range(1, k):
            y = y + w_ref[j] * s_ext[:, j:j + g]
        gate = jax.nn.sigmoid(y).astype(o_ref.dtype)                       # (rows, g)

        # 3) expand the gate across each channel's hw lanes and rescale.
        gate_wide = jnp.zeros((rows, width), o_ref.dtype)
        for j in range(g):
            gate_wide = jnp.where(grp == j, gate[:, j:j + 1], gate_wide)
        o_ref[...] = x_t * gate_wide

    return kernel


# ---------------------------------------------------------------------------
# Wrapper.
# ---------------------------------------------------------------------------

def eca_forward(x, conv_w, *, channel_tile=None, fold_spatial=True, donate_x=False):
    """Forward pass of the PyTorch ECA module.

    x: (B, C, H, W) f32/bf16;  conv_w: (1, 1, k) PyTorch Conv1d weight.
    channel_tile: force a channel tile for the tiled (un-folded) path.
    fold_spatial: allow the lane-dense fold for HW < 128 feature maps.
    donate_x:     alias x's buffer to the output (only if the caller can donate
                  x; skipped on the halo path, where x is read by 3 operands).
    """
    B, C, H, W = x.shape
    HW = H * W
    k = conv_w.shape[-1]
    pad = (k - 1) // 2
    itemsize = jnp.dtype(x.dtype).itemsize
    block_budget, vmem_limit = _vmem_budgets()

    # Fold the average pool's 1/(H*W) into the conv taps (SMEM scalar prefetch).
    w_scaled = conv_w.reshape(k).astype(jnp.float32) * (1.0 / HW)

    # ---- lane-dense folded path (HW < 128): whole C per grid step, no halo ----
    g = None
    if fold_spatial and channel_tile is None:
        g = _pick_spatial_fold(C, HW, pad, itemsize, block_budget)
    if g is not None:
        # TODO(synk): for B == 1 this is a single grid step (one v7x TensorCore);
        # a two-pass HW partial-sum split would engage both cores.
        rows = C // g
        xr = x.reshape(B, rows, g * HW)          # free, contiguous reshape
        spec = pl.BlockSpec((pl.Squeezed(), rows, g * HW), lambda b, w_sm: (b, 0, 0))
        out = pl.pallas_call(
            _make_eca_folded_kernel(k=k, pad=pad, g=g, hw=HW, rows=rows),
            out_shape=jax.ShapeDtypeStruct((B, rows, g * HW), x.dtype),
            grid_spec=pltpu.PrefetchScalarGridSpec(
                num_scalar_prefetch=1,
                grid=(B,),
                in_specs=[spec],
                out_specs=spec,
            ),
            compiler_params=pltpu.CompilerParams(
                dimension_semantics=("parallel",),
                vmem_limit_bytes=vmem_limit,
            ),
            # operand indices include the scalar-prefetch arg: x is operand 1.
            input_output_aliases={1: 0} if donate_x else {},
        )(w_scaled, xr)
        return out.reshape(B, C, H, W)

    # ---- channel-tiled path --------------------------------------------------
    Ct = channel_tile if channel_tile is not None else _pick_channel_tile(
        C, HW, itemsize, B, block_budget)
    if C % Ct != 0 or (Ct != C and Ct % 8 != 0):
        Ct = C                                   # fall back: one tile per image
    nct = C // Ct

    sub = _sublane_granule(itemsize)             # halo slab height: sublane-pack aligned
    if Ct % sub == 0:
        halo_c = sub
    elif Ct % 8 == 0:
        halo_c = 8
    else:
        halo_c = Ct
    use_halo = (nct > 1) and (pad > 0)
    if use_halo:
        assert pad <= halo_c, "ECA kernel size too large for the halo slab"
    c_blocks = max(C // halo_c, 1)               # number of halo blocks along C
    ct_blocks = max(Ct // halo_c, 1)

    def tile_map(b, i, w_sm):
        return (b, i, 0)

    def left_map(b, i, w_sm):
        return (b, jnp.maximum(i * ct_blocks - 1, 0), 0)

    def right_map(b, i, w_sm):
        return (b, jnp.minimum((i + 1) * ct_blocks, c_blocks - 1), 0)

    in_specs = [pl.BlockSpec((pl.Squeezed(), Ct, HW), tile_map)]
    if use_halo:
        in_specs += [
            pl.BlockSpec((pl.Squeezed(), halo_c, HW), left_map),
            pl.BlockSpec((pl.Squeezed(), halo_c, HW), right_map),
        ]

    kernel = _make_eca_kernel(k=k, pad=pad, nct=nct, use_halo=use_halo,
                              halo_c=halo_c)
    xr = x.reshape(B, C, HW)
    args = (w_scaled, xr, xr, xr) if use_halo else (w_scaled, xr)
    io_aliases = {1: 0} if (donate_x and not use_halo) else {}

    out = pl.pallas_call(
        kernel,
        out_shape=jax.ShapeDtypeStruct((B, C, HW), x.dtype),
        grid_spec=pltpu.PrefetchScalarGridSpec(
            num_scalar_prefetch=1,
            grid=(B, nct),
            in_specs=in_specs,
            out_specs=pl.BlockSpec((pl.Squeezed(), Ct, HW), tile_map),
        ),
        compiler_params=pltpu.CompilerParams(
            dimension_semantics=("parallel", "parallel"),
            vmem_limit_bytes=vmem_limit,
        ),
        input_output_aliases=io_aliases,
    )(*args)
    return out.reshape(B, C, H, W)


# ---------------------------------------------------------------------------
# Reference / helpers / tests.
# ---------------------------------------------------------------------------

def eca_reference(x, conv_w):
    """Pure-JAX reference of the PyTorch ECA forward pass (f32)."""
    k = conv_w.shape[-1]
    pad = (k - 1) // 2
    xf = x.astype(jnp.float32)
    pooled = jnp.mean(xf, axis=(2, 3))                      # (B, C)
    w = conv_w.reshape(k).astype(jnp.float32)
    padded = jnp.pad(pooled, ((0, 0), (pad, pad)))
    y = sum(w[j] * padded[:, j:j + pooled.shape[1]] for j in range(k))
    gate = jax.nn.sigmoid(y)[:, :, None, None]
    return xf * gate


def _eca_kernel_size(channels, gamma=2, b=1):
    t = int(abs((math.log(channels, 2) + b) / gamma))
    return t if t % 2 else t + 1


if __name__ == "__main__":
    key = jax.random.PRNGKey(0)
    kx, kw, kx2, kw2, kx3, kw3, kx4, kw4 = jax.random.split(key, 8)

    # 1) module-sized small input (B=2, C=8, 16x16), f32: single-tile path.
    B, C, H, W = 2, 8, 16, 16
    k = _eca_kernel_size(C)                                  # C=8 -> k=3
    x = jax.random.normal(kx, (B, C, H, W), dtype=jnp.float32)
    bound = 1.0 / math.sqrt(1 * k)
    conv_w = jax.random.uniform(kw, (1, 1, k), jnp.float32, -bound, bound)
    out = jax.block_until_ready(eca_forward(x, conv_w))
    ref = eca_reference(x, conv_w)
    assert out.shape == (B, C, H, W)
    assert jnp.allclose(out, ref, atol=1e-5, rtol=1e-5), "f32 mismatch"

    # 2) channel-tiled + halo path (forced small tile), f32 and bf16.
    B2, C2, H2, W2 = 2, 32, 16, 16
    k2 = _eca_kernel_size(C2)                                # C=32 -> k=3
    x2 = jax.random.normal(kx2, (B2, C2, H2, W2), dtype=jnp.float32)
    bound2 = 1.0 / math.sqrt(1 * k2)
    conv_w2 = jax.random.uniform(kw2, (1, 1, k2), jnp.float32, -bound2, bound2)
    out2 = jax.block_until_ready(eca_forward(x2, conv_w2, channel_tile=8))
    ref2 = eca_reference(x2, conv_w2)
    assert jnp.allclose(out2, ref2, atol=1e-5, rtol=1e-5), "tiled f32 mismatch"
    x2b = x2.astype(jnp.bfloat16)
    out2b = jax.block_until_ready(eca_forward(x2b, conv_w2, channel_tile=8))
    ref2b = eca_reference(x2b.astype(jnp.float32), conv_w2)
    assert out2b.dtype == jnp.bfloat16
    assert jnp.allclose(out2b.astype(jnp.float32), ref2b, atol=3e-2, rtol=3e-2), \
        "tiled bf16 mismatch"

    # 3) lane-dense folded path (8x8 maps, HW=64 < 128), f32 and bf16,
    #    plus the un-folded fallback on the same data.
    B3, C3, H3, W3 = 2, 32, 8, 8
    k3 = _eca_kernel_size(C3)
    x3 = jax.random.normal(kx3, (B3, C3, H3, W3), dtype=jnp.float32)
    bound3 = 1.0 / math.sqrt(1 * k3)
    conv_w3 = jax.random.uniform(kw3, (1, 1, k3), jnp.float32, -bound3, bound3)
    assert _pick_spatial_fold(C3, H3 * W3, (k3 - 1) // 2, 4,
                              _vmem_budgets()[0]) is not None
    out3 = jax.block_until_ready(eca_forward(x3, conv_w3))
    ref3 = eca_reference(x3, conv_w3)
    assert jnp.allclose(out3, ref3, atol=1e-5, rtol=1e-5), "folded f32 mismatch"
    x3b = x3.astype(jnp.bfloat16)
    out3b = jax.block_until_ready(eca_forward(x3b, conv_w3))
    ref3b = eca_reference(x3b.astype(jnp.float32), conv_w3)
    assert out3b.dtype == jnp.bfloat16
    assert jnp.allclose(out3b.astype(jnp.float32), ref3b, atol=3e-2, rtol=3e-2), \
        "folded bf16 mismatch"
    out3u = jax.block_until_ready(eca_forward(x3, conv_w3, fold_spatial=False))
    assert jnp.allclose(out3u, ref3, atol=1e-5, rtol=1e-5), "unfolded fallback mismatch"

    # 4) folded path on a 7x7 map (HW=49, non-multiple-of-128 lane width), f32.
    B4, C4, H4, W4 = 2, 64, 7, 7
    k4 = _eca_kernel_size(C4)
    x4 = jax.random.normal(kx4, (B4, C4, H4, W4), dtype=jnp.float32)
    bound4 = 1.0 / math.sqrt(1 * k4)
    conv_w4 = jax.random.uniform(kw4, (1, 1, k4), jnp.float32, -bound4, bound4)
    out4 = jax.block_until_ready(eca_forward(x4, conv_w4))
    ref4 = eca_reference(x4, conv_w4)
    assert jnp.allclose(out4, ref4, atol=1e-5, rtol=1e-5), "7x7 folded mismatch"

    print("KERNEL_OK")
</pallas_src>

<mosaic_0001>
module attributes {stable_mosaic.version = 11 : i64} {
  func.func @kernel(%arg0: i32, %arg1: i32, %arg2: memref<3xf32, #tpu.memory_space<smem>>, %arg3: memref<1x8x256xf32, #tpu.memory_space<vmem>>, %arg4: memref<1x8x256xf32, #tpu.memory_space<vmem>>) attributes {dimension_semantics = [#tpu.dimension_semantics<parallel>, #tpu.dimension_semantics<parallel>], iteration_bounds = array<i64: 2, 1>, scalar_prefetch = 1 : i64, scratch_operands = 0 : i64, tpu.core_type = #tpu.core_type<tc>, window_params = [{transform_indices = @transform_0, window_bounds = array<i64: 1, 8, 256>}, {transform_indices = @transform_1, window_bounds = array<i64: 1, 8, 256>}]} {
    %c0 = arith.constant 0 : index
    %c0_0 = arith.constant 0 : index
    %c0_1 = arith.constant 0 : index
    %0 = vector.load %arg3[%c0, %c0_0, %c0_1] : memref<1x8x256xf32, #tpu.memory_space<vmem>>, vector<1x8x256xf32>
    %1 = vector.shape_cast %0 : vector<1x8x256xf32> to vector<8x256xf32>
    %cst = arith.constant dense<0.000000e+00> : vector<8xf32>
    %2 = vector.multi_reduction <add>, %1, %cst [1] : vector<8x256xf32> to vector<8xf32>
    %3 = vector.shape_cast %2 : vector<8xf32> to vector<8x1xf32>
    %cst_2 = arith.constant 0.000000e+00 : f32
    %4 = vector.broadcast %cst_2 : f32 to vector<1x1xf32>
    %cst_3 = arith.constant 0.000000e+00 : f32
    %5 = vector.broadcast %cst_3 : f32 to vector<1x1xf32>
    %6 = tpu.concatenate %4, %3, %5 in 0 : vector<1x1xf32>, vector<8x1xf32>, vector<1x1xf32> -> vector<10x1xf32>
    %c0_4 = arith.constant 0 : index
    %7 = memref.load %arg2[%c0_4] : memref<3xf32, #tpu.memory_space<smem>>
    %8 = vector.extract_strided_slice %6 {offsets = [0, 0], sizes = [8, 1], strides = [1, 1]} : vector<10x1xf32> to vector<8x1xf32>
    %9 = vector.broadcast %7 : f32 to vector<8x1xf32>
    %10 = arith.mulf %9, %8 : vector<8x1xf32>
    %c1 = arith.constant 1 : index
    %11 = memref.load %arg2[%c1] : memref<3xf32, #tpu.memory_space<smem>>
    %12 = vector.extract_strided_slice %6 {offsets = [1, 0], sizes = [8, 1], strides = [1, 1]} : vector<10x1xf32> to vector<8x1xf32>
    %13 = vector.broadcast %11 : f32 to vector<8x1xf32>
    %14 = arith.mulf %13, %12 : vector<8x1xf32>
    %15 = arith.addf %10, %14 : vector<8x1xf32>
    %c2 = arith.constant 2 : index
    %16 = memref.load %arg2[%c2] : memref<3xf32, #tpu.memory_space<smem>>
    %17 = vector.extract_strided_slice %6 {offsets = [2, 0], sizes = [8, 1], strides = [1, 1]} : vector<10x1xf32> to vector<8x1xf32>
    %18 = vector.broadcast %16 : f32 to vector<8x1xf32>
    %19 = arith.mulf %18, %17 : vector<8x1xf32>
    %20 = arith.addf %15, %19 : vector<8x1xf32>
    %21 = arith.negf %20 : vector<8x1xf32>
    %22 = math.exp %21 : vector<8x1xf32>
    %cst_5 = arith.constant 1.000000e+00 : f32
    %23 = vector.broadcast %cst_5 : f32 to vector<8x1xf32>
    %24 = arith.addf %23, %22 : vector<8x1xf32>
    %25 = arith.divf %23, %24 : vector<8x1xf32>
    %26 = vector.broadcast %25 : vector<8x1xf32> to vector<8x256xf32>
    %27 = arith.mulf %1, %26 : vector<8x256xf32>
    %c0_6 = arith.constant 0 : index
    %c0_7 = arith.constant 0 : index
    %c0_8 = arith.constant 0 : index
    %28 = vector.load %arg4[%c0_6, %c0_7, %c0_8] : memref<1x8x256xf32, #tpu.memory_space<vmem>>, vector<1x8x256xf32>
    %29 = vector.shape_cast %28 : vector<1x8x256xf32> to vector<8x256xf32>
    %30 = vector.shape_cast %27 : vector<8x256xf32> to vector<1x8x256xf32>
    tpu.vector_store %arg4[%c0_6, %c0_7, %c0_8], %30 {strides = array<i32>} : memref<1x8x256xf32, #tpu.memory_space<vmem>>, vector<1x8x256xf32>,
    return
  }
  func.func @transform_0(%arg0: i32, %arg1: i32, %arg2: memref<3xf32, #tpu.memory_space<smem>>) -> (i32, i32, i32) {
    %c0_i32 = arith.constant 0 : i32
    %c0_i32_0 = arith.constant 0 : i32
    return %arg0, %arg1, %c0_i32 : i32, i32, i32
  }
  func.func @transform_1(%arg0: i32, %arg1: i32, %arg2: memref<3xf32, #tpu.memory_space<smem>>) -> (i32, i32, i32) {
    %c0_i32 = arith.constant 0 : i32
    %c0_i32_0 = arith.constant 0 : i32
    return %arg0, %arg1, %c0_i32 : i32, i32, i32
  }
}

</mosaic_0001>

<llo_original>
// kernel: tpu_custom_call.1
$region0: #{tpu_custom_call.1}
  #allocation0 [shape = 'u32[]', space=smem, size = 0x4, offset = 0x4, fixed_abs, tag = 'smem constant byte address 0x4 - core index']
  #allocation1 [shape = 'u32[72,128]{1,0:T(1,128)}', space=vmem, size = 0x9000, scoped, tag = 'internal scratch']
  #allocation2 [shape = 's32[1]{0}', space=sflag, size = 0x4, scoped, tag = 'scoped memory for tpu_custom_call.1']
  #allocation3 [shape = 'u8[512]{0}', space=smem, size = 0x200, scoped, tag = 'prefetched SMEM operand 0']
  %s0 = inlined_call_operand.hbm [shape: f32[3], index: 0, kind: input, shape index: {}]
  %s1 = inlined_call_operand.hbm [shape: f32[2,8,256], index: 1, kind: input, shape index: {}]
  %s2 = inlined_call_operand.hbm [shape: f32[2,8,256], index: 2, kind: output, shape index: {}]
  %s3 = sld [smem:[#allocation0]]
  $region41: #{tpu_custom_call.1} parent=0
    _
  %s5 = ssub.s32 1, %s3
  %s6 = scalar_select 0, %s5, %s3
  %s8 = sshll.u32 %s0, 4
  %s9 = int_to_ptr.hbm [resolvable:$true] %s8
  %11 = dma.hbm_to_smem %s9, 16, [#allocation3], [#allocation2]
  %13 = dma.done [#allocation2], 16
  %14 = sfence
  $region1: #{tpu_custom_call.1} parent=0
    #allocation4 [shape = 'u8[16384]{0}', space=vmem, size = 0x4000, scoped, tag = 'input window, operand 1']
    #allocation5 [shape = 's32[2]{0}', space=sflag, size = 0x8, scoped, tag = 'scoped memory for tpu_custom_call.1']
    #allocation6 [shape = 's32[2]{0}', space=sflag, size = 0x8, scoped, tag = 'scoped memory for tpu_custom_call.1']
    #allocation7 [shape = 'u8[16384]{0}', space=vmem, size = 0x4000, scoped, tag = 'output window, operand 0']
    %15 = vsyncpa [#allocation5], 0
    %s16 = scalar_lea.sflag [#allocation5], 1
    %17 = vsyncpa %s16, 0
    %18 = vsyncpa [#allocation6], 0
    %s19 = scalar_lea.sflag [#allocation6], 1
    %20 = vsyncpa %s19, 0
    loop: start=0, step=1, limit=4
    $region2: #{tpu_custom_call.1} parent=1 // loop_pre_header
      _
    $region3: #{tpu_custom_call.1} parent=1 // loop_header
      %s22 = sphi 0, %s26
      %p23 = scmp.ge.s32.totalorder %s22, 4
      %s29 = sphi 0, %s41
      %s30 = sphi 0, %s37
      %s31 = sphi 0, %s29
      %s32 = sphi 0, %s30
      %s33 = sphi 0, %s31
      %s34 = sphi 0, %s32
      %s46 = sphi 0, %s48
      %s49 = sphi 0, %s46
      %s50 = sphi 0, %s49
      %s66 = sphi 0, %s50
      %s74 = sphi 0, %s76
      %s77 = sphi 0, %s74
      %s78 = sphi 0, %s77
      %s94 = sphi 0, %s78
    $region4: #{tpu_custom_call.1} parent=1 // loop_header_branch
      %25 = sbr.rel (%p23) target = $region8
    $region5: #{tpu_custom_call.1} parent=1 // loop_body
      %s27 = ssub.s32 %s22, 1
      %s28 = ssub.s32 %s22, 2
      %s35 = sadd.s32 1, %s30
      %p36 = scmp.ge.s32.totalorder %s35, 1
      %s37 = scalar_select %p36, 0, %s35
      %s38 = sadd.s32 1, %s29
      %s39 = scalar_select %p36, %s38, %s29
      %p40 = scmp.ge.s32.totalorder %s39, 2
      %s41 = scalar_select %p40, 0, %s39
      %s42 = ssub.s32 %s29, %s41
      %s43 = ssub.s32 %s30, %s37
      %s44 = sor.u32 %s42, %s43
      %p45 = scmp.eq.s32.totalorder %s44, 0
      %s47 = sadd.s32 %s46, 1
      %s48 = scalar_select %p45, %s46, %s47
      %p51 = pneg %p45
      %p52 = scmp.eq.s32.totalorder %s22, 1
      %p53 = por %p51, %p52
      %p54 = scmp.ne.s32.totalorder %s46, %s49
      %p55 = scmp.eq.s32.totalorder %s22, 0
      %p56 = por %p54, %p55
      %p57 = scmp.ne.s32.totalorder %s46, %s49
      %p58 = scmp.eq.s32.totalorder %s27, 1
      %p59 = por %p57, %p58
      %p60 = scmp.ne.s32.totalorder %s49, %s50
      %p61 = scmp.eq.s32.totalorder %s27, 0
      %p62 = por %p60, %p61
      %p63 = scmp.ne.s32.totalorder %s49, %s50
      %p64 = scmp.eq.s32.totalorder %s28, 1
      %p65 = por %p63, %p64
      %p67 = scmp.ne.s32.totalorder %s50, %s66
      %p68 = scmp.eq.s32.totalorder %s28, 0
      %p69 = por %p67, %p68
      %s70 = ssub.s32 %s29, %s41
      %s71 = ssub.s32 %s30, %s37
      %s72 = sor.u32 %s70, %s71
      %p73 = scmp.eq.s32.totalorder %s72, 0
      %s75 = sadd.s32 %s74, 1
      %s76 = scalar_select %p73, %s74, %s75
      %p79 = pneg %p73
      %p80 = scmp.eq.s32.totalorder %s22, 1
      %p81 = por %p79, %p80
      %p82 = scmp.ne.s32.totalorder %s74, %s77
      %p83 = scmp.eq.s32.totalorder %s22, 0
      %p84 = por %p82, %p83
      %p85 = scmp.ne.s32.totalorder %s74, %s77
      %p86 = scmp.eq.s32.totalorder %s27, 1
      %p87 = por %p85, %p86
      %p88 = scmp.ne.s32.totalorder %s77, %s78
      %p89 = scmp.eq.s32.totalorder %s27, 0
      %p90 = por %p88, %p89
      %p91 = scmp.ne.s32.totalorder %s77, %s78
      %p92 = scmp.eq.s32.totalorder %s28, 1
      %p93 = por %p91, %p92
      %p95 = scmp.ne.s32.totalorder %s78, %s94
      %p96 = scmp.eq.s32.totalorder %s28, 0
      %p97 = por %p95, %p96
      %p98 = scmp.le.s32.totalorder 1, %s22
      %p99 = scmp.lt.s32.totalorder %s22, 3
      %p100 = pnand %p98, %p99
      %p101 = pneg %p100
      // Predicated region
      $region9: #{tpu_custom_call.1} parent=5 // pred_check
        _
      $region10: #{tpu_custom_call.1} parent=5 // pred_check_branch
        %103 = sbr.rel (%p100) target = $region12
      $region11: #{tpu_custom_call.1} parent=5 // pred_region
        %s104 = ssub.s32 %s22, 1
      $region12: #{tpu_custom_call.1} parent=5 // pred_fallthru
        _
      %p105 = scmp.lt.s32.totalorder %s22, 2
      // Predicated region
      $region13: #{tpu_custom_call.1} parent=5 // pred_check
        %p106 = pneg %p105
      $region14: #{tpu_custom_call.1} parent=5 // pred_check_branch
        %108 = sbr.rel (%p106) target = $region16
      $region15: #{tpu_custom_call.1} parent=5 // pred_region
        // Predicated region
        $region17: #{tpu_custom_call.1} parent=15 // pred_check
          %p109 = pneg %p56
        $region18: #{tpu_custom_call.1} parent=15 // pred_check_branch
          %111 = sbr.rel (%p109) target = $region20
        $region19: #{tpu_custom_call.1} parent=15 // pred_region
          %s112 = sand.u32 %s46, 1
          %s113 = scalar_lea.sflag [#allocation5], %s112
          %s114 = sand.u32 %s46, 1
          %s115 = smul.addr %s114, 16
          %s116 = scalar_lea.vmem [#allocation4], %s115
          %118 = vsyncadd %s113, 0
          %s119 = smul.addr %s30, 2
          %s120 = smul.addr %s29, 2
          %s121 = sadd.s32 %s119, %s120
          %s122 = smul.addr %s121, 8
          %s123 = scalar_lea.hbm %s1, %s122
          %s125 = sshll.u32 %s123, 4
          %s126 = int_to_ptr.hbm [resolvable:$true] %s125
          %s127 = sshll.u32 %s116, 4
          %s128 = int_to_ptr.vmem [resolvable:$true] %s127
          %130 = dma.hbm_to_vmem [thread:$0]  %s126, 256, %s128, %s113
        $region20: #{tpu_custom_call.1} parent=15 // pred_fallthru
          _
      $region16: #{tpu_custom_call.1} parent=5 // pred_fallthru
        _
      %p131 = scmp.le.s32.totalorder 1, %s22
      %p132 = scmp.lt.s32.totalorder %s22, 3
      %p133 = pnand %p131, %p132
      %p134 = pneg %p133
      // Predicated region
      $region21: #{tpu_custom_call.1} parent=5 // pred_check
        _
      $region22: #{tpu_custom_call.1} parent=5 // pred_check_branch
        %136 = sbr.rel (%p133) target = $region24
      $region23: #{tpu_custom_call.1} parent=5 // pred_region
        %s137 = ssub.s32 %s22, 1
        %s138 = sand.u32 %s49, 1
        %s139 = scalar_lea.sflag [#allocation5], %s138
        %s140 = sand.u32 %s49, 1
        %s141 = smul.addr %s140, 16
        %s142 = scalar_lea.vmem [#allocation4], %s141
        // Predicated region
        $region25: #{tpu_custom_call.1} parent=23 // pred_check
          %p143 = pneg %p62
        $region26: #{tpu_custom_call.1} parent=23 // pred_check_branch
          %145 = sbr.rel (%p143) target = $region28
        $region27: #{tpu_custom_call.1} parent=23 // pred_region
          %147 = dma.done %s139, 256
        $region28: #{tpu_custom_call.1} parent=23 // pred_fallthru
          _
        %s148 = sand.u32 %s49, 1
        %s149 = scalar_lea.sflag [#allocation5], %s148
        %s150 = sand.u32 %s49, 1
        %s151 = smul.addr %s150, 16
        %s152 = scalar_lea.vmem [#allocation4], %s151
        %p153 = pneg %p62
        %p154 = pneg %p59
        %p155 = pneg %p90
        %p156 = pneg %p87
        %s157 = sand.u32 %s77, 1
        %s158 = scalar_lea.sflag [#allocation6], %s157
        %s159 = sand.u32 %s77, 1
        %s160 = smul.addr %s159, 16
        %s161 = scalar_lea.vmem [#allocation7], %s160
        %v162 = vld [vmem:[%s142] sm:$0xff]
        %v163 = vld [vmem:[%s142 + $0x8] sm:$0xff]
        %v164 = vadd.f32 %v162, %v163
        %165 = vadd.xlane.f32.xlu0 %v164
        %v166 = vpop.xlane.xlu0 %165
        %v168 = vrot.slane %v166, 7
        %vm170 = vcmask 1040384
        %v171 = vsel %vm170, 0.0, %v168
        %v172 = vsel %vm170, %v168, 0.0
        %s173 = sld [smem:[#allocation3]]
        %v174 = vstv %s173
        %v175 = vmul.f32 %v174, %v171
        %s176 = sld [smem:[#allocation3 + $0x1]]
        %v177 = vstv %s176
        %v178 = vmul.f32 %v177, %v171
        %v179 = vmul.f32 %v177, %v172
        %vm182 = vcmask 1046528
        %v183 = vrot.slane %v178, 1
        %v184 = vrot.slane %v179, 1
        %v185 = vsel %vm182, %v183, %v184
        %v187 = vadd.f32 %v175, %v185
        %s188 = sld [smem:[#allocation3 + $0x2]]
        %v189 = vstv %s188
        %v190 = vmul.f32 %v189, %v171
        %v191 = vmul.f32 %v189, %v172
        %vm194 = vcmask 1045504
        %v195 = vrot.slane %v190, 2
        %v196 = vrot.slane %v191, 2
        %v197 = vsel %vm194, %v195, %v196
        %v199 = vadd.f32 %v187, %v197
        %v200 = vxor.u32 %v199, 2147483648
        %v201 = vmul.f32 %v200, 1.442695
        %v202 = vpow.pop %v201
        %v203 = vadd.f32 %v202, 1.0
        %v204 = vrcp.pop %v203
        %v205 = vmul.f32 %v203, %v204
        %v206 = vsub.f32 1.0, %v205
        %v207 = vmul.f32 %v204, %v206
        %v208 = vadd.f32 %v204, %v207
        %vm209 = vweird.f32 %v203
        %vm210 = vweird.f32 %v204
        %vm211 = vmor %vm209, %vm210
        %v212 = vsel %vm211, %v204, %v208
        %v213 = vand.u32 2147483647, %v203
        %vm214 = vcmp.eq.f32.partialorder %v213, 8.507059e+37
        %v215 = vand.u32 %v203, 2147483648
        %v216 = vor.u32 1.1754944e-38, %v215
        %v217 = vsel %vm214, %v216, %v212
        %v218 = vmul.f32 1.0, %v217
        %220 = vset.pattern.permute.xlu0 0
        %221 = vperm.xlu0 %220, %v218
        %v222 = vpop.permute.xlu0 %221
        %v224 = vmul.f32 %v162, %v222
        %v225 = vmul.f32 %v163, %v222
        %226 = vst [vmem:[%s161] sm:$0xff] %v224
        %227 = vst [vmem:[%s161 + $0x8] sm:$0xff] %v225
        %s228 = sand.u32 %s77, 1
        %s229 = scalar_lea.sflag [#allocation6], %s228
        %s230 = sand.u32 %s77, 1
        %s231 = smul.addr %s230, 16
        %s232 = scalar_lea.vmem [#allocation7], %s231
        // Predicated region
        $region29: #{tpu_custom_call.1} parent=23 // pred_check
          %p233 = pneg %p87
        $region30: #{tpu_custom_call.1} parent=23 // pred_check_branch
          %235 = sbr.rel (%p233) target = $region32
        $region31: #{tpu_custom_call.1} parent=23 // pred_region
          %237 = vsyncadd %s229, 0
          %s238 = smul.addr %s32, 2
          %s239 = smul.addr %s31, 2
          %s240 = sadd.s32 %s238, %s239
          %s241 = smul.addr %s240, 8
          %s242 = scalar_lea.hbm %s2, %s241
          %s244 = sshll.u32 %s232, 4
          %s245 = int_to_ptr.vmem [resolvable:$true] %s244
          %s246 = sshll.u32 %s242, 4
          %s247 = int_to_ptr.hbm [resolvable:$true] %s246
          %249 = dma.vmem_to_hbm [thread:$0]  %s245, 256, %s247, %s229
        $region32: #{tpu_custom_call.1} parent=23 // pred_fallthru
          _
      $region24: #{tpu_custom_call.1} parent=5 // pred_fallthru
        _
      %p250 = scmp.le.s32.totalorder 2, %s22
      // Predicated region
      $region33: #{tpu_custom_call.1} parent=5 // pred_check
        %p251 = pneg %p250
      $region34: #{tpu_custom_call.1} parent=5 // pred_check_branch
        %253 = sbr.rel (%p251) target = $region36
      $region35: #{tpu_custom_call.1} parent=5 // pred_region
        %s254 = ssub.s32 %s22, 2
        // Predicated region
        $region37: #{tpu_custom_call.1} parent=35 // pred_check
          %p255 = pneg %p93
        $region38: #{tpu_custom_call.1} parent=35 // pred_check_branch
          %257 = sbr.rel (%p255) target = $region40
        $region39: #{tpu_custom_call.1} parent=35 // pred_region
          %s258 = sand.u32 %s78, 1
          %s259 = scalar_lea.sflag [#allocation6], %s258
          %s260 = sand.u32 %s78, 1
          %s261 = smul.addr %s260, 16
          %s262 = scalar_lea.vmem [#allocation7], %s261
          %264 = dma.done %s259, 256
        $region40: #{tpu_custom_call.1} parent=35 // pred_fallthru
          _
      $region36: #{tpu_custom_call.1} parent=5 // pred_fallthru
        _
    $region6: #{tpu_custom_call.1} parent=1 // loop_footer
      %s26 = sadd.s32 1, %s22
    $region7: #{tpu_custom_call.1} parent=1 // loop_footer_branch
      %21 = sbr.rel target = $region3
    $region8: #{tpu_custom_call.1} parent=1 // loop_exit
      _
    %265 = vsyncpa [#allocation5], 1
    %s266 = scalar_lea.sflag [#allocation5], 1
    %267 = vsyncpa %s266, 1
    %268 = vsyncpa [#allocation6], 1
    %s269 = scalar_lea.sflag [#allocation6], 1
    %270 = vsyncpa %s269, 1

</llo_original>
